<compile_context>
chip_gen: v7x
topology: tpu7x:2x2x1
jax: 0.10.0
libtpu: 0.0.40
codegen_flags: <defaults>
</compile_context>

<pallas_src>
import functools

import jax
import jax.numpy as jnp
from jax.experimental import pallas as pl
from jax.experimental.pallas import tpu as pltpu


def _round_up(n, m):
    return ((n + m - 1) // m) * m


def _ae_kernel(seed_ref, x_ref, gw_ref, gb_ref, hw_ref, hb_ref, o_ref,
               *, p, training, tile_b, nq_pad):
    """One batch tile: dropout -> g -> sigmoid -> h -> sigmoid."""
    xb = x_ref[...]  # bf16 [TB, nq_pad]

    if training:
        # Counter-based hash PRNG (splitmix32-style finalizer) over the global
        # element index, mixed with the user seed.  Pure jnp integer ops ->
        # lowers on TPU (VPU int path) and in interpret mode.
        i = pl.program_id(0)
        row = jax.lax.broadcasted_iota(jnp.int32, xb.shape, 0) + i * tile_b
        col = jax.lax.broadcasted_iota(jnp.int32, xb.shape, 1)
        idx = row * nq_pad + col
        h = idx.astype(jnp.uint32) + seed_ref[0].astype(jnp.uint32) * jnp.uint32(0x9E3779B9)
        h = h ^ (h >> 16)
        h = h * jnp.uint32(0x7FEB352D)
        h = h ^ (h >> 15)
        h = h * jnp.uint32(0x846CA68B)
        h = h ^ (h >> 16)
        # Top 24 bits -> integer-domain Bernoulli(keep = 1 - p) test.
        r24 = (h >> 8).astype(jnp.int32)               # values in [0, 2^24)
        keep = r24 >= jnp.int32(int(p * (1 << 24)))
        scale = jnp.asarray(1.0 / (1.0 - p), xb.dtype)
        xb = jnp.where(keep, xb * scale, jnp.zeros_like(xb))

    # g: Linear(num_question -> k), Sigmoid  (bf16 MXU, f32 accumulate)
    h1 = jnp.dot(xb, gw_ref[...], preferred_element_type=jnp.float32) + gb_ref[...]
    h1 = jax.nn.sigmoid(h1)

    # h: Linear(k -> num_question), Sigmoid
    out = jnp.dot(h1.astype(jnp.bfloat16), hw_ref[...],
                  preferred_element_type=jnp.float32) + hb_ref[...]
    o_ref[...] = jax.nn.sigmoid(out).astype(o_ref.dtype)


def prepare_params(g_w, g_b, h_w, h_b):
    """One-time parameter prep: transpose to [in, out], cast to bf16, pad to
    lane-aligned (multiples of 128) shapes.  Padded rows/cols are zero so they
    contribute nothing to the matmuls."""
    k, nq = g_w.shape
    nq_p, k_p = _round_up(nq, 128), _round_up(k, 128)
    gw_t = jnp.zeros((nq_p, k_p), jnp.bfloat16).at[:nq, :k].set(
        jnp.asarray(g_w, jnp.bfloat16).T)
    hw_t = jnp.zeros((k_p, nq_p), jnp.bfloat16).at[:k, :nq].set(
        jnp.asarray(h_w, jnp.bfloat16).T)
    gb = jnp.zeros((1, k_p), jnp.float32).at[:, :k].set(jnp.asarray(g_b, jnp.float32))
    hb = jnp.zeros((1, nq_p), jnp.float32).at[:, :nq].set(jnp.asarray(h_b, jnp.float32))
    return dict(gw_t=gw_t, gb=gb, hw_t=hw_t, hb=hb,
                nq=nq, k=k, nq_p=nq_p, k_p=k_p)


def autoencoder_forward(x, params, *, seed=0, p=0.2, training=True, tile_b=256):
    """x: [B, num_question] -> [B, num_question] (float32)."""
    B, nq = x.shape
    assert nq == params["nq"]
    nq_p, k_p = params["nq_p"], params["k_p"]

    # Batch tiling: TB rows per grid step (multiple of 8; small B => single tile).
    TB = max(8, min(tile_b, _round_up(B, 8)))
    B_p = _round_up(B, TB)
    n_tiles = B_p // TB

    xp = jnp.zeros((B_p, nq_p), jnp.bfloat16).at[:B, :nq].set(
        jnp.asarray(x, jnp.bfloat16))
    seed_arr = jnp.asarray([seed], dtype=jnp.int32)

    kernel = functools.partial(_ae_kernel, p=float(p), training=bool(training),
                               tile_b=TB, nq_pad=nq_p)

    out = pl.pallas_call(
        kernel,
        out_shape=jax.ShapeDtypeStruct((B_p, nq_p), jnp.float32),
        grid_spec=pltpu.PrefetchScalarGridSpec(
            num_scalar_prefetch=1,                 # seed -> SMEM
            grid=(n_tiles,),
            in_specs=[
                pl.BlockSpec((TB, nq_p), lambda i, seed: (i, 0)),   # x tile
                pl.BlockSpec((nq_p, k_p), lambda i, seed: (0, 0)),  # g weight (resident)
                pl.BlockSpec((1, k_p), lambda i, seed: (0, 0)),     # g bias
                pl.BlockSpec((k_p, nq_p), lambda i, seed: (0, 0)),  # h weight (resident)
                pl.BlockSpec((1, nq_p), lambda i, seed: (0, 0)),    # h bias
            ],
            out_specs=pl.BlockSpec((TB, nq_p), lambda i, seed: (i, 0)),
        ),
        compiler_params=pltpu.CompilerParams(
            dimension_semantics=("parallel",)),
    )(seed_arr, xp, params["gw_t"], params["gb"], params["hw_t"], params["hb"])

    return out[:B, :nq]


def _reference_forward_no_dropout(x, g_w, g_b, h_w, h_b):
    """Pure-JAX reference emulating the kernel's bf16-in / f32-accumulate path."""
    xb = jnp.asarray(x, jnp.bfloat16)
    gwb = jnp.asarray(g_w, jnp.bfloat16)
    hwb = jnp.asarray(h_w, jnp.bfloat16)
    h1 = jax.nn.sigmoid(jnp.dot(xb, gwb.T, preferred_element_type=jnp.float32)
                        + jnp.asarray(g_b, jnp.float32))
    return jax.nn.sigmoid(jnp.dot(h1.astype(jnp.bfloat16), hwb.T,
                                  preferred_element_type=jnp.float32)
                          + jnp.asarray(h_b, jnp.float32))


def _init_linear(key, out_features, in_features):
    """PyTorch nn.Linear default init: U(-1/sqrt(in), 1/sqrt(in))."""
    kw, kb = jax.random.split(key)
    bound = 1.0 / jnp.sqrt(jnp.float32(in_features))
    w = jax.random.uniform(kw, (out_features, in_features), jnp.float32,
                           minval=-bound, maxval=bound)
    b = jax.random.uniform(kb, (out_features,), jnp.float32,
                           minval=-bound, maxval=bound)
    return w, b


if __name__ == "__main__":
    # Small shapes consistent with the module: B users, num_question items, k latent.
    B, NUM_QUESTION, K = 8, 256, 128

    root = jax.random.PRNGKey(0)
    kx, kg, kh = jax.random.split(root, 3)

    x = jax.random.uniform(kx, (B, NUM_QUESTION), jnp.float32)   # user vectors
    g_w, g_b = _init_linear(kg, K, NUM_QUESTION)                 # g.weight [k, nq]
    h_w, h_b = _init_linear(kh, NUM_QUESTION, K)                 # h.weight [nq, k]

    params = prepare_params(g_w, g_b, h_w, h_b)                  # one-time prep

    # Eval-mode path (dropout disabled) vs bf16-matmul pure-JAX reference.
    out_eval = autoencoder_forward(x, params, training=False)
    ref_eval = _reference_forward_no_dropout(x, g_w, g_b, h_w, h_b)
    jax.block_until_ready(out_eval)
    assert out_eval.shape == (B, NUM_QUESTION)
    assert jnp.allclose(out_eval, ref_eval, atol=5e-3, rtol=5e-3), "eval mismatch"

    # Training-mode forward (dropout p=0.2, deterministic given seed).
    out_train = autoencoder_forward(x, params, seed=0, p=0.2, training=True)
    jax.block_until_ready(out_train)
    assert out_train.shape == (B, NUM_QUESTION)
    assert bool(jnp.isfinite(out_train).all())

    # Different seed -> (almost surely) different dropout mask / output.
    out_train2 = autoencoder_forward(x, params, seed=1, p=0.2, training=True)
    jax.block_until_ready(out_train2)
    assert not bool(jnp.allclose(out_train, out_train2)), "dropout mask not seed-dependent"

    print("KERNEL_OK")
</pallas_src>

<mosaic_0001>
module attributes {stable_mosaic.version = 11 : i64} {
  func.func @_ae_kernel(%arg0: i32, %arg1: memref<1xi32, #tpu.memory_space<smem>>, %arg2: memref<8x256xbf16, #tpu.memory_space<vmem>>, %arg3: memref<256x128xbf16, #tpu.memory_space<vmem>>, %arg4: memref<1x128xf32, #tpu.memory_space<vmem>>, %arg5: memref<128x256xbf16, #tpu.memory_space<vmem>>, %arg6: memref<1x256xf32, #tpu.memory_space<vmem>>, %arg7: memref<8x256xf32, #tpu.memory_space<vmem>>) attributes {dimension_semantics = [#tpu.dimension_semantics<parallel>], iteration_bounds = array<i64: 1>, scalar_prefetch = 1 : i64, scratch_operands = 0 : i64, tpu.core_type = #tpu.core_type<tc>, window_params = [{transform_indices = @transform_0, window_bounds = array<i64: 8, 256>}, {pipeline_mode = #tpu.pipeline_mode<synchronous>, transform_indices = @transform_1, window_bounds = array<i64: 256, 128>}, {pipeline_mode = #tpu.pipeline_mode<synchronous>, transform_indices = @transform_2, window_bounds = array<i64: 1, 128>}, {pipeline_mode = #tpu.pipeline_mode<synchronous>, transform_indices = @transform_3, window_bounds = array<i64: 128, 256>}, {pipeline_mode = #tpu.pipeline_mode<synchronous>, transform_indices = @transform_4, window_bounds = array<i64: 1, 256>}, {transform_indices = @transform_5, window_bounds = array<i64: 8, 256>}]} {
    %c0 = arith.constant 0 : index
    %c0_0 = arith.constant 0 : index
    %0 = vector.load %arg2[%c0, %c0_0] : memref<8x256xbf16, #tpu.memory_space<vmem>>, vector<8x256xbf16>
    %c0_1 = arith.constant 0 : index
    %c0_2 = arith.constant 0 : index
    %1 = vector.load %arg3[%c0_1, %c0_2] : memref<256x128xbf16, #tpu.memory_space<vmem>>, vector<256x128xbf16>
    %cst = arith.constant dense<0.000000e+00> : vector<8x128xf32>
    %2 = tpu.matmul %0, %1, %cst {dimension_numbers = #tpu.dot_dimension_numbers<[1], [0], [0], [1], [0, 0, 1, 1], [], []>} : vector<8x256xbf16>, vector<256x128xbf16>, vector<8x128xf32> -> vector<8x128xf32>
    %c0_3 = arith.constant 0 : index
    %c0_4 = arith.constant 0 : index
    %3 = vector.load %arg4[%c0_3, %c0_4] : memref<1x128xf32, #tpu.memory_space<vmem>>, vector<1x128xf32>
    %4 = vector.broadcast %3 : vector<1x128xf32> to vector<8x128xf32>
    %5 = arith.addf %2, %4 : vector<8x128xf32>
    %6 = arith.negf %5 : vector<8x128xf32>
    %7 = math.exp %6 : vector<8x128xf32>
    %cst_5 = arith.constant 1.000000e+00 : f32
    %8 = vector.broadcast %cst_5 : f32 to vector<8x128xf32>
    %9 = arith.addf %8, %7 : vector<8x128xf32>
    %10 = arith.divf %8, %9 : vector<8x128xf32>
    %11 = arith.truncf %10 : vector<8x128xf32> to vector<8x128xbf16>
    %c0_6 = arith.constant 0 : index
    %c0_7 = arith.constant 0 : index
    %12 = vector.load %arg5[%c0_6, %c0_7] : memref<128x256xbf16, #tpu.memory_space<vmem>>, vector<128x256xbf16>
    %cst_8 = arith.constant dense<0.000000e+00> : vector<8x256xf32>
    %13 = tpu.matmul %11, %12, %cst_8 {dimension_numbers = #tpu.dot_dimension_numbers<[1], [0], [0], [1], [0, 0, 1, 1], [], []>} : vector<8x128xbf16>, vector<128x256xbf16>, vector<8x256xf32> -> vector<8x256xf32>
    %c0_9 = arith.constant 0 : index
    %c0_10 = arith.constant 0 : index
    %14 = vector.load %arg6[%c0_9, %c0_10] : memref<1x256xf32, #tpu.memory_space<vmem>>, vector<1x256xf32>
    %15 = vector.broadcast %14 : vector<1x256xf32> to vector<8x256xf32>
    %16 = arith.addf %13, %15 : vector<8x256xf32>
    %17 = arith.negf %16 : vector<8x256xf32>
    %18 = math.exp %17 : vector<8x256xf32>
    %cst_11 = arith.constant 1.000000e+00 : f32
    %19 = vector.broadcast %cst_11 : f32 to vector<8x256xf32>
    %20 = arith.addf %19, %18 : vector<8x256xf32>
    %21 = arith.divf %19, %20 : vector<8x256xf32>
    %c0_12 = arith.constant 0 : index
    %c0_13 = arith.constant 0 : index
    %22 = vector.load %arg7[%c0_12, %c0_13] : memref<8x256xf32, #tpu.memory_space<vmem>>, vector<8x256xf32>
    tpu.vector_store %arg7[%c0_12, %c0_13], %21 {strides = array<i32>} : memref<8x256xf32, #tpu.memory_space<vmem>>, vector<8x256xf32>,
    return
  }
  func.func @transform_0(%arg0: i32, %arg1: memref<1xi32, #tpu.memory_space<smem>>) -> (i32, i32) {
    %c0_i32 = arith.constant 0 : i32
    %c0_i32_0 = arith.constant 0 : i32
    return %arg0, %c0_i32 : i32, i32
  }
  func.func @transform_1(%arg0: i32, %arg1: memref<1xi32, #tpu.memory_space<smem>>) -> (i32, i32) {
    %c0_i32 = arith.constant 0 : i32
    %c0_i32_0 = arith.constant 0 : i32
    %c0_i32_1 = arith.constant 0 : i32
    return %c0_i32, %c0_i32_0 : i32, i32
  }
  func.func @transform_2(%arg0: i32, %arg1: memref<1xi32, #tpu.memory_space<smem>>) -> (i32, i32) {
    %c0_i32 = arith.constant 0 : i32
    %c0_i32_0 = arith.constant 0 : i32
    %c0_i32_1 = arith.constant 0 : i32
    return %c0_i32, %c0_i32_0 : i32, i32
  }
  func.func @transform_3(%arg0: i32, %arg1: memref<1xi32, #tpu.memory_space<smem>>) -> (i32, i32) {
    %c0_i32 = arith.constant 0 : i32
    %c0_i32_0 = arith.constant 0 : i32
    %c0_i32_1 = arith.constant 0 : i32
    return %c0_i32, %c0_i32_0 : i32, i32
  }
  func.func @transform_4(%arg0: i32, %arg1: memref<1xi32, #tpu.memory_space<smem>>) -> (i32, i32) {
    %c0_i32 = arith.constant 0 : i32
    %c0_i32_0 = arith.constant 0 : i32
    %c0_i32_1 = arith.constant 0 : i32
    return %c0_i32, %c0_i32_0 : i32, i32
  }
  func.func @transform_5(%arg0: i32, %arg1: memref<1xi32, #tpu.memory_space<smem>>) -> (i32, i32) {
    %c0_i32 = arith.constant 0 : i32
    %c0_i32_0 = arith.constant 0 : i32
    return %arg0, %c0_i32 : i32, i32
  }
}

</mosaic_0001>

<llo_original>
// kernel: tpu_custom_call.1
$region0: #{tpu_custom_call.1}
  #allocation0 [shape = 'u32[]', space=smem, size = 0x4, offset = 0x4, fixed_abs, tag = 'smem constant byte address 0x4 - core index']
  #allocation1 [shape = 'u32[144,128]{1,0:T(1,128)}', space=vmem, size = 0x12000, scoped, tag = 'internal scratch']
  #allocation2 [shape = 's32[1]{0}', space=sflag, size = 0x4, scoped, tag = 'scoped memory for tpu_custom_call.1']
  #allocation3 [shape = 's32[1]{0:T(128)S(6)}', space=smem, size = 0x200, scoped, tag = 'prefetched SMEM operand 0']
  %s0 = inlined_call_operand.<no memory space> [shape: s32[1], index: 0, kind: input, shape index: {}]
  %s1 = inlined_call_operand.hbm [shape: bf16[8,256], index: 1, kind: input, shape index: {}]
  %s2 = inlined_call_operand.hbm [shape: bf16[256,128], index: 2, kind: input, shape index: {}]
  %s3 = inlined_call_operand.vmem [shape: f32[1,128], index: 3, kind: input, shape index: {}]
  %s4 = inlined_call_operand.hbm [shape: bf16[128,256], index: 4, kind: input, shape index: {}]
  %s5 = inlined_call_operand.vmem [shape: f32[1,256], index: 5, kind: input, shape index: {}]
  %s6 = inlined_call_operand.hbm [shape: f32[8,256], index: 6, kind: output, shape index: {}]
  %s7 = sld [smem:[#allocation0]]
  $region42: #{tpu_custom_call.1} parent=0
    _
  %s9 = ssub.s32 1, %s7
  %s10 = scalar_select 0, %s9, %s7
  %11 = sst [smem:[#allocation3]] %s0
  $region1: #{tpu_custom_call.1} parent=0
    #allocation4 [shape = 'u8[4096]{0}', space=vmem, size = 0x1000, scoped, tag = 'input window, operand 1, single buffered']
    #allocation5 [shape = 's32[1]{0}', space=sflag, size = 0x4, scoped, tag = 'scoped memory for tpu_custom_call.1']
    #allocation6 [shape = 's32[1]{0}', space=sflag, size = 0x4, scoped, tag = 'scoped memory for tpu_custom_call.1']
    #allocation7 [shape = 'u8[65536]{0}', space=vmem, size = 0x10000, scoped, tag = 'input window, operand 2, single buffered']
    #allocation8 [shape = 's32[1]{0}', space=sflag, size = 0x4, scoped, tag = 'scoped memory for tpu_custom_call.1']
    #allocation9 [shape = 'u8[65536]{0}', space=vmem, size = 0x10000, scoped, tag = 'input window, operand 4, single buffered']
    #allocation10 [shape = 'u8[8192]{0}', space=vmem, size = 0x2000, scoped, tag = 'output window, operand 0, single buffered']
    %12 = vsyncpa [#allocation5], 0
    %13 = vsyncpa [#allocation8], 0
    %14 = vsyncpa [#allocation6], 0
    // Predicated region
    $region2: #{tpu_custom_call.1} parent=1 // pred_check
      _
    $region3: #{tpu_custom_call.1} parent=1 // pred_check_branch
      %16 = sbr.rel (0) target = $region5
    $region4: #{tpu_custom_call.1} parent=1 // pred_region
      %s18 = ssub.s32 128, 128
      %19 = vsyncadd [#allocation5], %s18
      %s21 = sshll.u32 [#allocation4], 4
      %s22 = int_to_ptr.vmem [resolvable:$true] %s21
      %24 = dma.hbm_to_vmem [thread:$0]  %s1, 128, %s22, [#allocation5]
    $region5: #{tpu_custom_call.1} parent=1 // pred_fallthru
      _
    // Predicated region
    $region6: #{tpu_custom_call.1} parent=1 // pred_check
      _
    $region7: #{tpu_custom_call.1} parent=1 // pred_check_branch
      %26 = sbr.rel (0) target = $region9
    $region8: #{tpu_custom_call.1} parent=1 // pred_region
      %s28 = ssub.s32 2048, 2048
      %29 = vsyncadd [#allocation8], %s28
      %s30 = sshll.u32 [#allocation7], 4
      %s31 = int_to_ptr.vmem [resolvable:$true] %s30
      %36 = dma.hbm_to_vmem [thread:$0]  %s2, 2048, %s31, [#allocation8], 64, 64, 4
    $region9: #{tpu_custom_call.1} parent=1 // pred_fallthru
      _
    // Predicated region
    $region10: #{tpu_custom_call.1} parent=1 // pred_check
      _
    $region11: #{tpu_custom_call.1} parent=1 // pred_check_branch
      %38 = sbr.rel (0) target = $region13
    $region12: #{tpu_custom_call.1} parent=1 // pred_region
      _
    $region13: #{tpu_custom_call.1} parent=1 // pred_fallthru
      _
    // Predicated region
    $region14: #{tpu_custom_call.1} parent=1 // pred_check
      _
    $region15: #{tpu_custom_call.1} parent=1 // pred_check_branch
      %40 = sbr.rel (0) target = $region17
    $region16: #{tpu_custom_call.1} parent=1 // pred_region
      %s42 = ssub.s32 2048, 2048
      %43 = vsyncadd [#allocation8], %s42
      %s44 = sshll.u32 [#allocation9], 4
      %s45 = int_to_ptr.vmem [resolvable:$true] %s44
      %50 = dma.hbm_to_vmem [thread:$0]  %s4, 2048, %s45, [#allocation8], 128, 128, 8
    $region17: #{tpu_custom_call.1} parent=1 // pred_fallthru
      _
    // Predicated region
    $region18: #{tpu_custom_call.1} parent=1 // pred_check
      _
    $region19: #{tpu_custom_call.1} parent=1 // pred_check_branch
      %52 = sbr.rel (0) target = $region21
    $region20: #{tpu_custom_call.1} parent=1 // pred_region
      _
    $region21: #{tpu_custom_call.1} parent=1 // pred_fallthru
      _
    // Predicated region
    $region22: #{tpu_custom_call.1} parent=1 // pred_check
      _
    $region23: #{tpu_custom_call.1} parent=1 // pred_check_branch
      %54 = sbr.rel (0) target = $region25
    $region24: #{tpu_custom_call.1} parent=1 // pred_region
      %55 = dma.done [#allocation5], 128
    $region25: #{tpu_custom_call.1} parent=1 // pred_fallthru
      _
    // Predicated region
    $region26: #{tpu_custom_call.1} parent=1 // pred_check
      _
    $region27: #{tpu_custom_call.1} parent=1 // pred_check_branch
      %57 = sbr.rel (0) target = $region29
    $region28: #{tpu_custom_call.1} parent=1 // pred_region
      %58 = dma.done [#allocation8], 2048
    $region29: #{tpu_custom_call.1} parent=1 // pred_fallthru
      _
    // Predicated region
    $region30: #{tpu_custom_call.1} parent=1 // pred_check
      _
    $region31: #{tpu_custom_call.1} parent=1 // pred_check_branch
      %60 = sbr.rel (0) target = $region33
    $region32: #{tpu_custom_call.1} parent=1 // pred_region
      %61 = dma.done [#allocation8], 2048
    $region33: #{tpu_custom_call.1} parent=1 // pred_fallthru
      _
    %v63 = vld [vmem:[#allocation4] sm:$0xff]
    %v64 = vld [vmem:[#allocation7] sm:$0xf]
    %v65 = vld [vmem:[#allocation7 + $0x4] sm:$0xf]
    %v66 = vld [vmem:[#allocation7 + $0x8] sm:$0xf]
    %v67 = vld [vmem:[#allocation7 + $0xc] sm:$0xf]
    %v68 = vld [vmem:[#allocation7 + $0x10] sm:$0xf]
    %v69 = vld [vmem:[#allocation7 + $0x14] sm:$0xf]
    %v70 = vld [vmem:[#allocation7 + $0x18] sm:$0xf]
    %v71 = vld [vmem:[#allocation7 + $0x1c] sm:$0xf]
    %v72 = vld [vmem:[#allocation7 + $0x20] sm:$0xf]
    %v73 = vld [vmem:[#allocation7 + $0x24] sm:$0xf]
    %v74 = vld [vmem:[#allocation7 + $0x28] sm:$0xf]
    %v75 = vld [vmem:[#allocation7 + $0x2c] sm:$0xf]
    %v76 = vld [vmem:[#allocation7 + $0x30] sm:$0xf]
    %v77 = vld [vmem:[#allocation7 + $0x34] sm:$0xf]
    %v78 = vld [vmem:[#allocation7 + $0x38] sm:$0xf]
    %v79 = vld [vmem:[#allocation7 + $0x3c] sm:$0xf]
    %v80 = vld [vmem:[#allocation7 + $0x40] sm:$0xf]
    %v81 = vld [vmem:[#allocation7 + $0x44] sm:$0xf]
    %v82 = vld [vmem:[#allocation7 + $0x48] sm:$0xf]
    %v83 = vld [vmem:[#allocation7 + $0x4c] sm:$0xf]
    %v84 = vld [vmem:[#allocation7 + $0x50] sm:$0xf]
    %v85 = vld [vmem:[#allocation7 + $0x54] sm:$0xf]
    %v86 = vld [vmem:[#allocation7 + $0x58] sm:$0xf]
    %v87 = vld [vmem:[#allocation7 + $0x5c] sm:$0xf]
    %v88 = vld [vmem:[#allocation7 + $0x60] sm:$0xf]
    %v89 = vld [vmem:[#allocation7 + $0x64] sm:$0xf]
    %v90 = vld [vmem:[#allocation7 + $0x68] sm:$0xf]
    %v91 = vld [vmem:[#allocation7 + $0x6c] sm:$0xf]
    %v92 = vld [vmem:[#allocation7 + $0x70] sm:$0xf]
    %v93 = vld [vmem:[#allocation7 + $0x74] sm:$0xf]
    %v94 = vld [vmem:[#allocation7 + $0x78] sm:$0xf]
    %v95 = vld [vmem:[#allocation7 + $0x7c] sm:$0xf]
    %v96 = vld [vmem:[%s3] sm:$0x1]
    %v98 = vlaneseq
    %v99 = vshrl.u32 %v98, 7
    %v100 = vsub.s32 0, %v99
    %v101 = vrot.slane %v96, %v100
    %v104 = vunpack.c.l.b16 %v63
    %v105 = vunpack.c.h.b16 %v63
    %v106 = vpack.c.b16 %v104, %v104
    %v107 = vpack.c.b16 %v105, %v105
    %v142 = vunpack.c.l.b16 %v64
    %v143 = vunpack.c.l.b16 %v65
    %v144 = vunpack.c.l.b16 %v66
    %v145 = vunpack.c.l.b16 %v67
    %v146 = vunpack.c.l.b16 %v68
    %v147 = vunpack.c.l.b16 %v69
    %v148 = vunpack.c.l.b16 %v70
    %v149 = vunpack.c.l.b16 %v71
    %v150 = vunpack.c.l.b16 %v72
    %v151 = vunpack.c.l.b16 %v73
    %v152 = vunpack.c.l.b16 %v74
    %v153 = vunpack.c.l.b16 %v75
    %v154 = vunpack.c.l.b16 %v76
    %v155 = vunpack.c.l.b16 %v77
    %v156 = vunpack.c.l.b16 %v78
    %v157 = vunpack.c.l.b16 %v79
    %v158 = vunpack.c.l.b16 %v80
    %v159 = vunpack.c.l.b16 %v81
    %v160 = vunpack.c.l.b16 %v82
    %v161 = vunpack.c.l.b16 %v83
    %v162 = vunpack.c.l.b16 %v84
    %v163 = vunpack.c.l.b16 %v85
    %v164 = vunpack.c.l.b16 %v86
    %v165 = vunpack.c.l.b16 %v87
    %v166 = vunpack.c.l.b16 %v88
    %v167 = vunpack.c.l.b16 %v89
    %v168 = vunpack.c.l.b16 %v90
    %v169 = vunpack.c.l.b16 %v91
    %v170 = vunpack.c.l.b16 %v92
    %v171 = vunpack.c.l.b16 %v93
    %v172 = vunpack.c.l.b16 %v94
    %v173 = vunpack.c.l.b16 %v95
    %v174 = vpack.c.b16 %v143, %v142
    %v175 = vpack.c.b16 %v145, %v144
    %v176 = vpack.c.b16 %v147, %v146
    %v177 = vpack.c.b16 %v149, %v148
    %v178 = vpack.c.b16 %v151, %v150
    %v179 = vpack.c.b16 %v153, %v152
    %v180 = vpack.c.b16 %v155, %v154
    %v181 = vpack.c.b16 %v157, %v156
    %v182 = vpack.c.b16 %v159, %v158
    %v183 = vpack.c.b16 %v161, %v160
    %v184 = vpack.c.b16 %v163, %v162
    %v185 = vpack.c.b16 %v165, %v164
    %v186 = vpack.c.b16 %v167, %v166
    %v187 = vpack.c.b16 %v169, %v168
    %v188 = vpack.c.b16 %v171, %v170
    %v189 = vpack.c.b16 %v173, %v172
    %206 = vmatprep.subr.bf16.mxu0 0
    %207 = vmatpush1.bf16.msra.mxu0 %v174
    %208 = vmatprep.subr.bf16.mxu0 0
    %209 = vmatpush1.bf16.msra.mxu0 %v175
    %210 = vmatprep.subr.bf16.mxu0 0
    %211 = vmatpush1.bf16.msra.mxu0 %v176
    %212 = vmatprep.subr.bf16.mxu0 0
    %213 = vmatpush1.bf16.msra.mxu0 %v177
    %214 = vmatprep.subr.bf16.mxu0 0
    %215 = vmatpush1.bf16.msra.mxu0 %v178
    %216 = vmatprep.subr.bf16.mxu0 0
    %217 = vmatpush1.bf16.msra.mxu0 %v179
    %218 = vmatprep.subr.bf16.mxu0 0
    %219 = vmatpush1.bf16.msra.mxu0 %v180
    %220 = vmatprep.subr.bf16.mxu0 0
    %221 = vmatpush1.bf16.msra.mxu0 %v181
    %222 = vmatprep.subr.bf16.mxu0 0
    %223 = vmatpush1.bf16.msra.mxu0 %v182
    %224 = vmatprep.subr.bf16.mxu0 0
    %225 = vmatpush1.bf16.msra.mxu0 %v183
    %226 = vmatprep.subr.bf16.mxu0 0
    %227 = vmatpush1.bf16.msra.mxu0 %v184
    %228 = vmatprep.subr.bf16.mxu0 0
    %229 = vmatpush1.bf16.msra.mxu0 %v185
    %230 = vmatprep.subr.bf16.mxu0 0
    %231 = vmatpush1.bf16.msra.mxu0 %v186
    %232 = vmatprep.subr.bf16.mxu0 0
    %233 = vmatpush1.bf16.msra.mxu0 %v187
    %234 = vmatprep.subr.bf16.mxu0 0
    %235 = vmatpush1.bf16.msra.mxu0 %v188
    %236 = vmatprep.subr.bf16.mxu0 0
    %237 = vmatpush1.bf16.msra.mxu0 %v189
    %238 = vmatprep.mubr.bf16.mxu0 %v107
    %239 = vmatmul.mubr.bf16.gmra.mrb[0].mxu0 %v106
    %v240 = vpop.f32.mrb[0].mxu0
    %v241 = vadd.f32 %v101, %v240
    %v242 = vpop.f32.mrb[0].mxu0
    %v243 = vpop.f32.mrb[0].mxu0
    %v244 = vpop.f32.mrb[0].mxu0
    %245 = vdwg.mxu0
    %v246 = vxor.u32 %v241, 2147483648
    %v247 = vmul.f32 %v246, 1.442695
    %v248 = vpow.pop %v247
    %v249 = vadd.f32 %v248, 1.0
    %v250 = vrcp.pop %v249
    %v251 = vmul.f32 1.0, %v250
    %v252 = vpack.c.bf16 %v251, %v251
    %v253 = vld [vmem:[#allocation9] sm:$0xff]
    %v254 = vld [vmem:[#allocation9 + $0x8] sm:$0xff]
    %v255 = vld [vmem:[#allocation9 + $0x10] sm:$0xff]
    %v256 = vld [vmem:[#allocation9 + $0x18] sm:$0xff]
    %v257 = vld [vmem:[#allocation9 + $0x20] sm:$0xff]
    %v258 = vld [vmem:[#allocation9 + $0x28] sm:$0xff]
    %v259 = vld [vmem:[#allocation9 + $0x30] sm:$0xff]
    %v260 = vld [vmem:[#allocation9 + $0x38] sm:$0xff]
    %v261 = vld [vmem:[#allocation9 + $0x40] sm:$0xff]
    %v262 = vld [vmem:[#allocation9 + $0x48] sm:$0xff]
    %v263 = vld [vmem:[#allocation9 + $0x50] sm:$0xff]
    %v264 = vld [vmem:[#allocation9 + $0x58] sm:$0xff]
    %v265 = vld [vmem:[#allocation9 + $0x60] sm:$0xff]
    %v266 = vld [vmem:[#allocation9 + $0x68] sm:$0xff]
    %v267 = vld [vmem:[#allocation9 + $0x70] sm:$0xff]
    %v268 = vld [vmem:[#allocation9 + $0x78] sm:$0xff]
    %v269 = vld [vmem:[%s5] sm:$0x3]
    %v271 = vlaneseq
    %v272 = vshrl.u32 %v271, 7
    %v273 = vsub.s32 0, %v272
    %v274 = vrot.slane %v269, %v273
    %v275 = vlaneseq
    %v276 = vshrl.u32 %v275, 7
    %v277 = vsub.s32 1, %v276
    %v278 = vrot.slane %v269, %v277
    %v297 = vunpack.c.l.b16 %v253
    %v298 = vunpack.c.h.b16 %v253
    %v299 = vunpack.c.l.b16 %v254
    %v300 = vunpack.c.h.b16 %v254
    %v301 = vunpack.c.l.b16 %v255
    %v302 = vunpack.c.h.b16 %v255
    %v303 = vunpack.c.l.b16 %v256
    %v304 = vunpack.c.h.b16 %v256
    %v305 = vunpack.c.l.b16 %v257
    %v306 = vunpack.c.h.b16 %v257
    %v307 = vunpack.c.l.b16 %v258
    %v308 = vunpack.c.h.b16 %v258
    %v309 = vunpack.c.l.b16 %v259
    %v310 = vunpack.c.h.b16 %v259
    %v311 = vunpack.c.l.b16 %v260
    %v312 = vunpack.c.h.b16 %v260
    %v313 = vunpack.c.l.b16 %v261
    %v314 = vunpack.c.h.b16 %v261
    %v315 = vunpack.c.l.b16 %v262
    %v316 = vunpack.c.h.b16 %v262
    %v317 = vunpack.c.l.b16 %v263
    %v318 = vunpack.c.h.b16 %v263
    %v319 = vunpack.c.l.b16 %v264
    %v320 = vunpack.c.h.b16 %v264
    %v321 = vunpack.c.l.b16 %v265
    %v322 = vunpack.c.h.b16 %v265
    %v323 = vunpack.c.l.b16 %v266
    %v324 = vunpack.c.h.b16 %v266
    %v325 = vunpack.c.l.b16 %v267
    %v326 = vunpack.c.h.b16 %v267
    %v327 = vunpack.c.l.b16 %v268
    %v328 = vunpack.c.h.b16 %v268
    %v329 = vpack.c.b16 %v299, %v297
    %v330 = vpack.c.b16 %v300, %v298
    %v331 = vpack.c.b16 %v303, %v301
    %v332 = vpack.c.b16 %v304, %v302
    %v333 = vpack.c.b16 %v307, %v305
    %v334 = vpack.c.b16 %v308, %v306
    %v335 = vpack.c.b16 %v311, %v309
    %v336 = vpack.c.b16 %v312, %v310
    %v337 = vpack.c.b16 %v315, %v313
    %v338 = vpack.c.b16 %v316, %v314
    %v339 = vpack.c.b16 %v319, %v317
    %v340 = vpack.c.b16 %v320, %v318
    %v341 = vpack.c.b16 %v323, %v321
    %v342 = vpack.c.b16 %v324, %v322
    %v343 = vpack.c.b16 %v327, %v325
    %v344 = vpack.c.b16 %v328, %v326
    %361 = vmatprep.subr.bf16.mxu0 %v330
    %362 = vmatpush1.bf16.msra.mxu0 %v329
    %363 = vmatprep.subr.bf16.mxu0 %v332
    %364 = vmatpush1.bf16.msra.mxu0 %v331
    %365 = vmatprep.subr.bf16.mxu0 %v334
    %366 = vmatpush1.bf16.msra.mxu0 %v333
    %367 = vmatprep.subr.bf16.mxu0 %v336
    %368 = vmatpush1.bf16.msra.mxu0 %v335
    %369 = vmatprep.subr.bf16.mxu0 %v338
    %370 = vmatpush1.bf16.msra.mxu0 %v337
    %371 = vmatprep.subr.bf16.mxu0 %v340
    %372 = vmatpush1.bf16.msra.mxu0 %v339
    %373 = vmatprep.subr.bf16.mxu0 %v342
    %374 = vmatpush1.bf16.msra.mxu0 %v341
    %375 = vmatprep.subr.bf16.mxu0 %v344
    %376 = vmatpush1.bf16.msra.mxu0 %v343
    %377 = vmatprep.subr.bf16.mxu0 0
    %378 = vmatpush1.bf16.msra.mxu0 0
    %379 = vmatprep.subr.bf16.mxu0 0
    %380 = vmatpush1.bf16.msra.mxu0 0
    %381 = vmatprep.subr.bf16.mxu0 0
    %382 = vmatpush1.bf16.msra.mxu0 0
    %383 = vmatprep.subr.bf16.mxu0 0
    %384 = vmatpush1.bf16.msra.mxu0 0
    %385 = vmatprep.subr.bf16.mxu0 0
    %386 = vmatpush1.bf16.msra.mxu0 0
    %387 = vmatprep.subr.bf16.mxu0 0
    %388 = vmatpush1.bf16.msra.mxu0 0
    %389 = vmatprep.subr.bf16.mxu0 0
    %390 = vmatpush1.bf16.msra.mxu0 0
    %391 = vmatprep.subr.bf16.mxu0 0
    %392 = vmatpush1.bf16.msra.mxu0 0
    %393 = vmatprep.mubr.bf16.mxu0 0
    %394 = vmatmul.mubr.bf16.gmra.mrb[0].mxu0 %v252
    %v395 = vpop.f32.mrb[0].mxu0
    %v396 = vadd.f32 %v274, %v395
    %v397 = vpop.f32.mrb[0].mxu0
    %v398 = vadd.f32 %v278, %v397
    %v399 = vpop.f32.mrb[0].mxu0
    %v400 = vpop.f32.mrb[0].mxu0
    %401 = vdwg.mxu0
    %v402 = vxor.u32 %v396, 2147483648
    %v403 = vxor.u32 %v398, 2147483648
    %v404 = vmul.f32 %v402, 1.442695
    %v405 = vpow.pop %v404
    %v406 = vmul.f32 %v403, 1.442695
    %v407 = vpow.pop %v406
    %v408 = vadd.f32 %v405, 1.0
    %v409 = vadd.f32 %v407, 1.0
    %v410 = vrcp.pop %v408
    %v411 = vmul.f32 1.0, %v410
    %v412 = vrcp.pop %v409
    %v413 = vmul.f32 1.0, %v412
    %414 = vst [vmem:[#allocation10] sm:$0xff] %v411
    %415 = vst [vmem:[#allocation10 + $0x8] sm:$0xff] %v413
    // Predicated region
    $region34: #{tpu_custom_call.1} parent=1 // pred_check
      _
    $region35: #{tpu_custom_call.1} parent=1 // pred_check_branch
      %417 = sbr.rel (0) target = $region37
    $region36: #{tpu_custom_call.1} parent=1 // pred_region
      %s419 = ssub.s32 256, 256
      %420 = vsyncadd [#allocation6], %s419
      %s422 = sshll.u32 [#allocation10], 4
      %s423 = int_to_ptr.vmem [resolvable:$true] %s422
      %425 = dma.vmem_to_hbm [thread:$0]  %s423, 256, %s6, [#allocation6]
    $region37: #{tpu_custom_call.1} parent=1 // pred_fallthru
      _
    // Predicated region
    $region38: #{tpu_custom_call.1} parent=1 // pred_check
      _
    $region39: #{tpu_custom_call.1} parent=1 // pred_check_branch
      %427 = sbr.rel (0) target = $region41
    $region40: #{tpu_custom_call.1} parent=1 // pred_region
      %428 = dma.done [#allocation6], 256
    $region41: #{tpu_custom_call.1} parent=1 // pred_fallthru
      _
    %429 = vsyncpa [#allocation5], 1
    %430 = vsyncpa [#allocation8], 1
    %431 = vsyncpa [#allocation6], 1

</llo_original>
